<compile_context>
chip_gen: v7x
topology: tpu7x:2x2x1
jax: 0.10.0
libtpu: 0.0.40
codegen_flags: <defaults>
</compile_context>

<pallas_src>
import math

import jax
import jax.numpy as jnp
from jax import lax
from jax.experimental import pallas as pl
from jax.experimental.pallas import tpu as pltpu

_LANES = 128
_TARGET_BLOCK_BYTES = 4 << 20     # ~4 MiB per input per grid step
_TARGET_CHUNK_BYTES = 256 << 10   # f32 accumulator slab / in-flight temp size
_N_SPLITS = 2                     # leading "parallel" axis (one per TC on v7x)


def _round_up(x, m):
    return ((x + m - 1) // m) * m


def l1_loss_pallas(y_pred_logits, y_true):
    """Equivalent of torch.nn.L1Loss()(pred.float(), true.float()) (mean)."""
    assert y_pred_logits.shape == y_true.shape
    n = int(math.prod(y_pred_logits.shape))
    assert n > 0

    # Stream native dtype; upcast to f32 inside the kernel (free under the
    # HBM bound).
    p = y_pred_logits.reshape(-1)
    t = y_true.reshape(-1)

    # Rare fallback: if n is not a multiple of 128 we must pad to reshape into
    # a lane-dense slab.  |0 - 0| contributes nothing to the sum.
    # TODO(synk): this (rare, <=127-element) pad still copies both inputs; a
    # manual-DMA 1D kernel could avoid it entirely.
    if n % _LANES:
        pad = _round_up(n, _LANES) - n
        p = jnp.pad(p, (0, pad))
        t = jnp.pad(t, (0, pad))
    n_padded = _round_up(n, _LANES)

    # Largest lane-dense width that divides n exactly -> the reshape below is
    # a free bitcast (no HBM copy).
    width = next(w for w in (512, 256, 128) if n_padded % w == 0)
    rows = n_padded // width
    p2 = p.reshape(rows, width)
    t2 = t.reshape(rows, width)

    itemsize = max(jnp.dtype(p2.dtype).itemsize, jnp.dtype(t2.dtype).itemsize)

    # Chunk = accumulator slab (f32) streamed elementwise; block = DMA tile.
    chunk_rows = max(8, (_TARGET_CHUNK_BYTES // (width * 4)) // 8 * 8)
    if rows <= chunk_rows:
        # Tiny problem: one block == whole array, one chunk, no masking.
        chunk_rows = rows
        block_rows = rows
        n_chunks = 1
    else:
        target_rows = max(
            chunk_rows,
            (_TARGET_BLOCK_BYTES // (width * itemsize)) // chunk_rows * chunk_rows,
        )
        block_rows = min(target_rows, (rows // chunk_rows) * chunk_rows)
        n_chunks = block_rows // chunk_rows

    # Layout sanity: keeps every in-kernel slice (8,128)-tile aligned so no
    # relayout copies sneak in when constants change.
    assert width % _LANES == 0
    assert block_rows % chunk_rows == 0
    assert chunk_rows % 8 == 0 or block_rows == rows == chunk_rows

    nb = -(-rows // block_rows)                       # number of real blocks
    splits = _N_SPLITS if nb >= _N_SPLITS else 1
    bps = -(-nb // splits)                            # blocks per split

    def kernel(p_ref, t_ref, o_ref):
        blk = pl.program_id(0) * pl.num_programs(1) + pl.program_id(1)
        # Rows of this block that hold real data (<=0 for the overhang blocks
        # that the clamped index_map aliases onto the last real block).
        valid_rows = rows - blk * block_rows

        @pl.when(pl.program_id(1) == 0)
        def _():
            o_ref[...] = jnp.zeros_like(o_ref)

        def accumulate(masked):
            def body(ci, carry):
                r0 = pl.multiple_of(ci * chunk_rows, chunk_rows)
                pc = p_ref[pl.ds(r0, chunk_rows), :].astype(jnp.float32)
                tc = t_ref[pl.ds(r0, chunk_rows), :].astype(jnp.float32)
                d = jnp.abs(pc - tc)
                if masked:
                    row = lax.broadcasted_iota(
                        jnp.int32, (chunk_rows, width), 0) + r0
                    d = jnp.where(row < valid_rows, d, 0.0)
                o_ref[...] += d
                return carry

            lax.fori_loop(0, n_chunks, body, 0, unroll=True)

        @pl.when(valid_rows >= block_rows)      # hot path: fully valid block
        def _():
            accumulate(False)

        @pl.when(valid_rows < block_rows)       # cold path: tail / overhang
        def _():
            accumulate(True)

    # Clamp so overhang iterations of an uneven split stay in bounds; their
    # contribution is masked to zero inside the kernel.
    in_map = lambda c, i: (jnp.minimum(c * bps + i, nb - 1), 0)

    partials = pl.pallas_call(
        kernel,
        out_shape=jax.ShapeDtypeStruct((splits, chunk_rows, width), jnp.float32),
        grid_spec=pltpu.PrefetchScalarGridSpec(
            num_scalar_prefetch=0,
            grid=(splits, bps),
            in_specs=[
                pl.BlockSpec((block_rows, width), in_map),
                pl.BlockSpec((block_rows, width), in_map),
            ],
            out_specs=pl.BlockSpec((None, chunk_rows, width),
                                   lambda c, i: (c, 0, 0)),
        ),
        compiler_params=pltpu.CompilerParams(
            dimension_semantics=("parallel", "arbitrary"),
            vmem_limit_bytes=32 << 20,
        ),
    )(p2, t2)

    # Combine per-split lane-dense partial sums; mean over the TRUE count.
    return jnp.sum(partials) / jnp.float32(n)


if __name__ == "__main__":
    key = jax.random.PRNGKey(0)
    k1, k2, k3, k4 = jax.random.split(key, 4)

    # Small NCHW shapes consistent with the module's forward.
    bs, num_classes, h, w = 2, 4, 16, 16
    y_pred = jax.random.normal(k1, (bs, num_classes, h, w), dtype=jnp.float32)
    y_true = jax.random.normal(k2, (bs, num_classes, h, w), dtype=jnp.float32)

    loss = l1_loss_pallas(y_pred, y_true)
    loss = jax.block_until_ready(loss)
    ref = jnp.mean(jnp.abs(y_pred.astype(jnp.float32) - y_true.astype(jnp.float32)))
    assert jnp.allclose(loss, ref, rtol=1e-5, atol=1e-5), (loss, ref)

    # Second shape exercising the multi-block path (uneven split + masked
    # tail block) while still being small.
    y_pred2 = jax.random.normal(k3, (2, 4, 96, 100), dtype=jnp.float32)
    y_true2 = jax.random.normal(k4, (2, 4, 96, 100), dtype=jnp.float32)
    loss2 = jax.block_until_ready(l1_loss_pallas(y_pred2, y_true2))
    ref2 = jnp.mean(jnp.abs(y_pred2 - y_true2))
    assert jnp.allclose(loss2, ref2, rtol=1e-5, atol=1e-5), (loss2, ref2)

    print("KERNEL_OK")
</pallas_src>

<mosaic_0001>
module attributes {stable_mosaic.version = 11 : i64} {
  func.func @kernel(%arg0: i32, %arg1: i32, %arg2: memref<4x512xf32, #tpu.memory_space<vmem>>, %arg3: memref<4x512xf32, #tpu.memory_space<vmem>>, %arg4: memref<1x4x512xf32, #tpu.memory_space<vmem>>) attributes {dimension_semantics = [#tpu.dimension_semantics<parallel>, #tpu.dimension_semantics<arbitrary>], iteration_bounds = array<i64: 1, 1>, scalar_prefetch = 0 : i64, scratch_operands = 0 : i64, tpu.core_type = #tpu.core_type<tc>, window_params = [{transform_indices = @transform_0, window_bounds = array<i64: 4, 512>}, {transform_indices = @transform_1, window_bounds = array<i64: 4, 512>}, {transform_indices = @transform_2, window_bounds = array<i64: 1, 4, 512>}]} {
    %c1_i32 = arith.constant 1 : i32
    %0 = arith.muli %arg0, %c1_i32 : i32
    %1 = arith.addi %0, %arg1 : i32
    %c4_i32 = arith.constant 4 : i32
    %2 = arith.muli %1, %c4_i32 : i32
    %c4_i32_0 = arith.constant 4 : i32
    %3 = arith.subi %c4_i32_0, %2 : i32
    %c0_i32 = arith.constant 0 : i32
    %4 = arith.cmpi eq, %arg1, %c0_i32 : i32
    %5 = arith.extui %4 : i1 to i32
    %c0_i32_1 = arith.constant 0 : i32
    %6 = arith.cmpi ne, %5, %c0_i32_1 : i32
    scf.if %6 {
      %cst = arith.constant 0.000000e+00 : f32
      %13 = vector.broadcast %cst : f32 to vector<4x512xf32>
      %c0 = arith.constant 0 : index
      %c0_6 = arith.constant 0 : index
      %c0_7 = arith.constant 0 : index
      %14 = vector.load %arg4[%c0, %c0_6, %c0_7] : memref<1x4x512xf32, #tpu.memory_space<vmem>>, vector<1x4x512xf32>
      %15 = vector.shape_cast %14 : vector<1x4x512xf32> to vector<4x512xf32>
      %16 = vector.shape_cast %13 : vector<4x512xf32> to vector<1x4x512xf32>
      tpu.vector_store %arg4[%c0, %c0_6, %c0_7], %16 {strides = array<i32>} : memref<1x4x512xf32, #tpu.memory_space<vmem>>, vector<1x4x512xf32>,
    } else {
    }
    %c4_i32_2 = arith.constant 4 : i32
    %7 = arith.cmpi sge, %3, %c4_i32_2 : i32
    %8 = arith.extui %7 : i1 to i32
    %c0_i32_3 = arith.constant 0 : i32
    %9 = arith.cmpi ne, %8, %c0_i32_3 : i32
    scf.if %9 {
      %c0_i32_6 = arith.constant 0 : i32
      %c4_i32_7 = arith.constant 4 : i32
      %13 = arith.muli %c0_i32_6, %c4_i32_7 : i32
      %14 = tpu.assume_multiple %13, 4 : i32
      %15 = arith.index_cast %14 : i32 to index
      %c0 = arith.constant 0 : index
      %16 = vector.load %arg2[%15, %c0] : memref<4x512xf32, #tpu.memory_space<vmem>>, vector<4x512xf32>
      %17 = arith.index_cast %14 : i32 to index
      %c0_8 = arith.constant 0 : index
      %18 = vector.load %arg3[%17, %c0_8] : memref<4x512xf32, #tpu.memory_space<vmem>>, vector<4x512xf32>
      %19 = arith.subf %16, %18 : vector<4x512xf32>
      %20 = math.absf %19 : vector<4x512xf32>
      %c0_9 = arith.constant 0 : index
      %c0_10 = arith.constant 0 : index
      %c0_11 = arith.constant 0 : index
      %21 = vector.load %arg4[%c0_9, %c0_10, %c0_11] : memref<1x4x512xf32, #tpu.memory_space<vmem>>, vector<1x4x512xf32>
      %22 = vector.shape_cast %21 : vector<1x4x512xf32> to vector<4x512xf32>
      %23 = arith.addf %22, %20 : vector<4x512xf32>
      %c0_12 = arith.constant 0 : index
      %c0_13 = arith.constant 0 : index
      %c0_14 = arith.constant 0 : index
      %24 = vector.load %arg4[%c0_12, %c0_13, %c0_14] : memref<1x4x512xf32, #tpu.memory_space<vmem>>, vector<1x4x512xf32>
      %25 = vector.shape_cast %24 : vector<1x4x512xf32> to vector<4x512xf32>
      %26 = vector.shape_cast %23 : vector<4x512xf32> to vector<1x4x512xf32>
      tpu.vector_store %arg4[%c0_12, %c0_13, %c0_14], %26 {strides = array<i32>} : memref<1x4x512xf32, #tpu.memory_space<vmem>>, vector<1x4x512xf32>,
      %c1_i32_15 = arith.constant 1 : i32
    } else {
    }
    %c4_i32_4 = arith.constant 4 : i32
    %10 = arith.cmpi slt, %3, %c4_i32_4 : i32
    %11 = arith.extui %10 : i1 to i32
    %c0_i32_5 = arith.constant 0 : i32
    %12 = arith.cmpi ne, %11, %c0_i32_5 : i32
    scf.if %12 {
      %c0_i32_6 = arith.constant 0 : i32
      %c4_i32_7 = arith.constant 4 : i32
      %13 = arith.muli %c0_i32_6, %c4_i32_7 : i32
      %14 = tpu.assume_multiple %13, 4 : i32
      %15 = arith.index_cast %14 : i32 to index
      %c0 = arith.constant 0 : index
      %16 = vector.load %arg2[%15, %c0] : memref<4x512xf32, #tpu.memory_space<vmem>>, vector<4x512xf32>
      %17 = arith.index_cast %14 : i32 to index
      %c0_8 = arith.constant 0 : index
      %18 = vector.load %arg3[%17, %c0_8] : memref<4x512xf32, #tpu.memory_space<vmem>>, vector<4x512xf32>
      %19 = arith.subf %16, %18 : vector<4x512xf32>
      %20 = math.absf %19 : vector<4x512xf32>
      %21 = tpu.iota {dimensions = array<i32: 0>} : vector<4x512xi32>
      %22 = vector.broadcast %14 : i32 to vector<4x512xi32>
      %23 = arith.addi %21, %22 : vector<4x512xi32>
      %24 = vector.broadcast %3 : i32 to vector<4x512xi32>
      %25 = arith.cmpi slt, %23, %24 : vector<4x512xi32>
      %cst = arith.constant 0.000000e+00 : f32
      %26 = vector.broadcast %cst : f32 to vector<4x512xf32>
      %27 = arith.select %25, %20, %26 : vector<4x512xi1>, vector<4x512xf32>
      %c0_9 = arith.constant 0 : index
      %c0_10 = arith.constant 0 : index
      %c0_11 = arith.constant 0 : index
      %28 = vector.load %arg4[%c0_9, %c0_10, %c0_11] : memref<1x4x512xf32, #tpu.memory_space<vmem>>, vector<1x4x512xf32>
      %29 = vector.shape_cast %28 : vector<1x4x512xf32> to vector<4x512xf32>
      %30 = arith.addf %29, %27 : vector<4x512xf32>
      %c0_12 = arith.constant 0 : index
      %c0_13 = arith.constant 0 : index
      %c0_14 = arith.constant 0 : index
      %31 = vector.load %arg4[%c0_12, %c0_13, %c0_14] : memref<1x4x512xf32, #tpu.memory_space<vmem>>, vector<1x4x512xf32>
      %32 = vector.shape_cast %31 : vector<1x4x512xf32> to vector<4x512xf32>
      %33 = vector.shape_cast %30 : vector<4x512xf32> to vector<1x4x512xf32>
      tpu.vector_store %arg4[%c0_12, %c0_13, %c0_14], %33 {strides = array<i32>} : memref<1x4x512xf32, #tpu.memory_space<vmem>>, vector<1x4x512xf32>,
      %c1_i32_15 = arith.constant 1 : i32
    } else {
    }
    return
  }
  func.func @transform_0(%arg0: i32, %arg1: i32) -> (i32, i32) {
    %c1_i32 = arith.constant 1 : i32
    %0 = arith.muli %arg0, %c1_i32 : i32
    %1 = arith.addi %0, %arg1 : i32
    %c0_i32 = arith.constant 0 : i32
    %2 = arith.minsi %1, %c0_i32 : i32
    %c0_i32_0 = arith.constant 0 : i32
    %c0_i32_1 = arith.constant 0 : i32
    return %2, %c0_i32_0 : i32, i32
  }
  func.func @transform_1(%arg0: i32, %arg1: i32) -> (i32, i32) {
    %c1_i32 = arith.constant 1 : i32
    %0 = arith.muli %arg0, %c1_i32 : i32
    %1 = arith.addi %0, %arg1 : i32
    %c0_i32 = arith.constant 0 : i32
    %2 = arith.minsi %1, %c0_i32 : i32
    %c0_i32_0 = arith.constant 0 : i32
    %c0_i32_1 = arith.constant 0 : i32
    return %2, %c0_i32_0 : i32, i32
  }
  func.func @transform_2(%arg0: i32, %arg1: i32) -> (i32, i32, i32) {
    %c0_i32 = arith.constant 0 : i32
    %c0_i32_0 = arith.constant 0 : i32
    %c0_i32_1 = arith.constant 0 : i32
    return %arg0, %c0_i32, %c0_i32_0 : i32, i32, i32
  }
}

</mosaic_0001>

<llo_original>
// kernel: tpu_custom_call.1
$region0: #{tpu_custom_call.1}
  #allocation0 [shape = 'u32[]', space=smem, size = 0x4, offset = 0x4, fixed_abs, tag = 'smem constant byte address 0x4 - core index']
  #allocation1 [shape = 'u32[144,128]{1,0:T(1,128)}', space=vmem, size = 0x12000, scoped, tag = 'internal scratch']
  %s0 = inlined_call_operand.hbm [shape: f32[4,512], index: 0, kind: input, shape index: {}]
  %s1 = inlined_call_operand.hbm [shape: f32[4,512], index: 1, kind: input, shape index: {}]
  %s2 = inlined_call_operand.hbm [shape: f32[1,4,512], index: 2, kind: output, shape index: {}]
  %s3 = sld [smem:[#allocation0]]
  $region38: #{tpu_custom_call.1} parent=0
    _
  %s5 = ssub.s32 1, %s3
  %s6 = scalar_select 0, %s5, %s3
  $region1: #{tpu_custom_call.1} parent=0
    #allocation2 [shape = 'u8[8192]{0}', space=vmem, size = 0x2000, scoped, tag = 'input window, operand 0, single buffered']
    #allocation3 [shape = 's32[1]{0}', space=sflag, size = 0x4, scoped, tag = 'scoped memory for tpu_custom_call.1']
    #allocation4 [shape = 's32[1]{0}', space=sflag, size = 0x4, scoped, tag = 'scoped memory for tpu_custom_call.1']
    #allocation5 [shape = 'u8[8192]{0}', space=vmem, size = 0x2000, scoped, tag = 'input window, operand 1, single buffered']
    #allocation6 [shape = 's32[1]{0}', space=sflag, size = 0x4, scoped, tag = 'scoped memory for tpu_custom_call.1']
    #allocation7 [shape = 'u8[8192]{0}', space=vmem, size = 0x2000, scoped, tag = 'output window, operand 0, single buffered']
    %7 = vsyncpa [#allocation3], 0
    %8 = vsyncpa [#allocation6], 0
    %9 = vsyncpa [#allocation4], 0
    // Predicated region
    $region2: #{tpu_custom_call.1} parent=1 // pred_check
      _
    $region3: #{tpu_custom_call.1} parent=1 // pred_check_branch
      %11 = sbr.rel (0) target = $region5
    $region4: #{tpu_custom_call.1} parent=1 // pred_region
      %s12 = sadd.s32 0, 0
      %p13 = scmp.lt.s32.totalorder %s12, 0
      %s14 = scalar_select %p13, %s12, 0
      %s16 = ssub.s32 256, 256
      %17 = vsyncadd [#allocation3], %s16
      %s18 = smul.addr %s14, 4
      %s19 = smul.addr %s18, 64
      %s20 = scalar_lea.hbm %s0, %s19
      %s22 = sshll.u32 [#allocation2], 4
      %s23 = int_to_ptr.vmem [resolvable:$true] %s22
      %25 = dma.hbm_to_vmem [thread:$0]  %s20, 256, %s23, [#allocation3]
    $region5: #{tpu_custom_call.1} parent=1 // pred_fallthru
      _
    // Predicated region
    $region6: #{tpu_custom_call.1} parent=1 // pred_check
      _
    $region7: #{tpu_custom_call.1} parent=1 // pred_check_branch
      %27 = sbr.rel (0) target = $region9
    $region8: #{tpu_custom_call.1} parent=1 // pred_region
      %s28 = sadd.s32 0, 0
      %p29 = scmp.lt.s32.totalorder %s28, 0
      %s30 = scalar_select %p29, %s28, 0
      %s32 = ssub.s32 256, 256
      %33 = vsyncadd [#allocation6], %s32
      %s34 = smul.addr %s30, 4
      %s35 = smul.addr %s34, 64
      %s36 = scalar_lea.hbm %s1, %s35
      %s38 = sshll.u32 [#allocation5], 4
      %s39 = int_to_ptr.vmem [resolvable:$true] %s38
      %41 = dma.hbm_to_vmem [thread:$0]  %s36, 256, %s39, [#allocation6]
    $region9: #{tpu_custom_call.1} parent=1 // pred_fallthru
      _
    // Predicated region
    $region10: #{tpu_custom_call.1} parent=1 // pred_check
      _
    $region11: #{tpu_custom_call.1} parent=1 // pred_check_branch
      %43 = sbr.rel (0) target = $region13
    $region12: #{tpu_custom_call.1} parent=1 // pred_region
      %44 = dma.done [#allocation3], 256
    $region13: #{tpu_custom_call.1} parent=1 // pred_fallthru
      _
    // Predicated region
    $region14: #{tpu_custom_call.1} parent=1 // pred_check
      _
    $region15: #{tpu_custom_call.1} parent=1 // pred_check_branch
      %46 = sbr.rel (0) target = $region17
    $region16: #{tpu_custom_call.1} parent=1 // pred_region
      %47 = dma.done [#allocation6], 256
    $region17: #{tpu_custom_call.1} parent=1 // pred_fallthru
      _
    %s48 = sadd.s32 0, 0
    %p49 = scmp.lt.s32.totalorder %s48, 0
    %s50 = scalar_select %p49, %s48, 0
    %s51 = sadd.s32 0, 0
    %p52 = scmp.lt.s32.totalorder %s51, 0
    %s53 = scalar_select %p52, %s51, 0
    %s54 = sadd.s32 0, 0
    %s55 = smul.u32 %s54, 4
    %s56 = ssub.s32 4, %s55
    %p57 = scmp.eq.s32.totalorder 0, 0
    // Predicated region
    $region18: #{tpu_custom_call.1} parent=1 // pred_check
      %p58 = pneg %p57
    $region19: #{tpu_custom_call.1} parent=1 // pred_check_branch
      %60 = sbr.rel (%p58) target = $region21
    $region20: #{tpu_custom_call.1} parent=1 // pred_region
      %61 = vst [vmem:[#allocation7] sm:$0xff] 0.0
      %62 = vst [vmem:[#allocation7 + $0x8] sm:$0xff] 0.0
    $region21: #{tpu_custom_call.1} parent=1 // pred_fallthru
      _
    %p63 = scmp.ge.s32.totalorder %s56, 4
    // Predicated region
    $region22: #{tpu_custom_call.1} parent=1 // pred_check
      %p64 = pneg %p63
    $region23: #{tpu_custom_call.1} parent=1 // pred_check_branch
      %66 = sbr.rel (%p64) target = $region25
    $region24: #{tpu_custom_call.1} parent=1 // pred_region
      %s67 = smul.u32 0, 4
      %s68 = smul.addr %s67, 4
      %s69 = scalar_lea.vmem [#allocation2], %s68
      %v70 = vld [vmem:[%s69] sm:$0xff]
      %v71 = vld [vmem:[%s69 + $0x8] sm:$0xff]
      %s72 = smul.addr %s67, 4
      %s73 = scalar_lea.vmem [#allocation5], %s72
      %v74 = vld [vmem:[%s73] sm:$0xff]
      %v75 = vld [vmem:[%s73 + $0x8] sm:$0xff]
      %v76 = vsub.f32 %v70, %v74
      %v77 = vsub.f32 %v71, %v75
      %v78 = vand.u32 2147483647, %v76
      %v79 = vand.u32 2147483647, %v77
      %v80 = vld [vmem:[#allocation7] sm:$0xff]
      %v81 = vld [vmem:[#allocation7 + $0x8] sm:$0xff]
      %v82 = vadd.f32 %v80, %v78
      %v83 = vadd.f32 %v81, %v79
      %84 = vst [vmem:[#allocation7] sm:$0xff] %v82
      %85 = vst [vmem:[#allocation7 + $0x8] sm:$0xff] %v83
    $region25: #{tpu_custom_call.1} parent=1 // pred_fallthru
      _
    %p86 = scmp.lt.s32.totalorder %s56, 4
    // Predicated region
    $region26: #{tpu_custom_call.1} parent=1 // pred_check
      %p87 = pneg %p86
    $region27: #{tpu_custom_call.1} parent=1 // pred_check_branch
      %89 = sbr.rel (%p87) target = $region29
    $region28: #{tpu_custom_call.1} parent=1 // pred_region
      %s90 = smul.u32 0, 4
      %s91 = smul.addr %s90, 4
      %s92 = scalar_lea.vmem [#allocation2], %s91
      %v93 = vld [vmem:[%s92] sm:$0xff]
      %v94 = vld [vmem:[%s92 + $0x8] sm:$0xff]
      %s95 = smul.addr %s90, 4
      %s96 = scalar_lea.vmem [#allocation5], %s95
      %v97 = vld [vmem:[%s96] sm:$0xff]
      %v98 = vld [vmem:[%s96 + $0x8] sm:$0xff]
      %v99 = vsub.f32 %v93, %v97
      %v100 = vsub.f32 %v94, %v98
      %v101 = vand.u32 2147483647, %v99
      %v102 = vand.u32 2147483647, %v100
      %v103 = vlaneseq
      %v104 = vshrl.u32 %v103, 7
      %v105 = vstv 0
      %v106 = vadd.s32 %v104, %v105
      %v107 = vstv %s56
      %vm108 = vcmp.lt.s32.totalorder %v106, %v107
      %v111 = vcombine.high %v101, %v101
      %v112 = vcombine.high %v102, %v102
      %v115 = vsel %vm108, %v101, 0.0
      %v116 = vsel %vm108, %v111, 0.0
      %v117 = vsel %vm108, %v102, 0.0
      %v118 = vsel %vm108, %v112, 0.0
      %v119 = vld [vmem:[#allocation7] sm:$0xff]
      %v120 = vld [vmem:[#allocation7 + $0x8] sm:$0xff]
      %v125 = vcombine.low %v115, %v116
      %v126 = vcombine.low %v117, %v118
      %v129 = vadd.f32 %v119, %v125
      %v130 = vadd.f32 %v120, %v126
      %131 = vst [vmem:[#allocation7] sm:$0xff] %v129
      %132 = vst [vmem:[#allocation7 + $0x8] sm:$0xff] %v130
    $region29: #{tpu_custom_call.1} parent=1 // pred_fallthru
      _
    // Predicated region
    $region30: #{tpu_custom_call.1} parent=1 // pred_check
      _
    $region31: #{tpu_custom_call.1} parent=1 // pred_check_branch
      %134 = sbr.rel (0) target = $region33
    $region32: #{tpu_custom_call.1} parent=1 // pred_region
      %s136 = ssub.s32 256, 256
      %137 = vsyncadd [#allocation4], %s136
      %s139 = sshll.u32 [#allocation7], 4
      %s140 = int_to_ptr.vmem [resolvable:$true] %s139
      %142 = dma.vmem_to_hbm [thread:$0]  %s140, 256, %s2, [#allocation4]
    $region33: #{tpu_custom_call.1} parent=1 // pred_fallthru
      _
    // Predicated region
    $region34: #{tpu_custom_call.1} parent=1 // pred_check
      _
    $region35: #{tpu_custom_call.1} parent=1 // pred_check_branch
      %144 = sbr.rel (0) target = $region37
    $region36: #{tpu_custom_call.1} parent=1 // pred_region
      %145 = dma.done [#allocation4], 256
    $region37: #{tpu_custom_call.1} parent=1 // pred_fallthru
      _
    %146 = vsyncpa [#allocation3], 1
    %147 = vsyncpa [#allocation6], 1
    %148 = vsyncpa [#allocation4], 1

</llo_original>
